<compile_context>
chip_gen: v6e
topology: v6e:2x2x1
jax: 0.10.0
libtpu: 0.0.40
codegen_flags: <defaults>
</compile_context>

<pallas_src>
import functools

import jax
import jax.numpy as jnp
from jax.experimental import pallas as pl
from jax.experimental.pallas import tpu as pltpu


def _round_up(x: int, m: int) -> int:
    return ((x + m - 1) // m) * m


def _attentive_reduce_kernel(feat_ref, seg_ref, w_ref, cnt_ref, out_ref,
                             acc_ref, den_ref, *, reducer: str):
    """One grid step == one (TILE_N, D) tile of rows.

    feat_ref : VMEM (TILE_N, D)          row tile, native dtype
    seg_ref  : VMEM (1, TILE_N) int32    graph id per row (-1 for padded rows)
    w_ref    : VMEM (D, 1)               Linear(D->1, no bias) weight column
    cnt_ref  : VMEM (B, 1) f32           per-graph sizes (only used for reducer='mean')
    out_ref  : VMEM (B, D)               readout, written once at the last step
    acc_ref  : VMEM scratch (B, D) f32   sum_{i in g} exp(s_i) * feat_i
    den_ref  : VMEM scratch (B, 1) f32   sum_{i in g} exp(s_i)
    """
    t = pl.program_id(0)
    nt = pl.num_programs(0)

    @pl.when(t == 0)
    def _init():
        acc_ref[...] = jnp.zeros_like(acc_ref)
        den_ref[...] = jnp.zeros_like(den_ref)

    feat = feat_ref[...]                                  # (TILE_N, D), native dtype
    w = w_ref[...].astype(feat.dtype)                     # (D, 1)

    # Attention logits on the MXU, activation on the EUP.
    s = jnp.dot(feat, w, preferred_element_type=jnp.float32)   # (TILE_N, 1) f32
    # sigmoid output lies in (0, 1) -> exp cannot overflow, no max-subtraction needed.
    e = jnp.exp(jax.nn.sigmoid(s))                        # (TILE_N, 1) f32
    e_ft = e.astype(feat.dtype)

    # Membership matrix: member[g, r] = 1 iff row r belongs to graph g.
    b = acc_ref.shape[0]
    tile_n = feat.shape[0]
    g_iota = jax.lax.broadcasted_iota(jnp.int32, (b, tile_n), 0)
    member = (seg_ref[...] == g_iota).astype(feat.dtype)  # (B, TILE_N); pad rows match none

    # Segment reductions as MXU matmuls, accumulated in f32.
    fe = feat * e_ft                                      # (TILE_N, D)  exp-weighted rows
    acc_ref[...] += jnp.dot(member, fe, preferred_element_type=jnp.float32)   # (B, D)
    den_ref[...] += jnp.dot(member, e_ft, preferred_element_type=jnp.float32) # (B, 1)

    @pl.when(t == nt - 1)
    def _finalize():
        den = den_ref[...]                                # (B, 1)
        inv = jnp.where(den > 0.0, pl.reciprocal(den), 0.0)   # empty-graph guard
        out = acc_ref[...] * inv                          # softmax-normalized weighted sum
        if reducer == "mean":
            cnt = cnt_ref[...]                            # (B, 1) f32
            out = out * jnp.where(cnt > 0.0, pl.reciprocal(cnt), 0.0)
        out_ref[...] = out.astype(out_ref.dtype)


def attentive_reduce(feat: jax.Array, sizes: jax.Array, w: jax.Array,
                     reducer: str = "sum", tile_n_max: int = 512) -> jax.Array:
    """feat: (N, D) float; sizes: (B,) int with sum(sizes) == N; w: (1, D).

    Returns the (B, D) attentive readout, one row per graph segment.
    """
    assert reducer in ("sum", "mean")
    n, d = feat.shape
    b = sizes.shape[0]
    sizes = sizes.astype(jnp.int32)

    # Row tiling: TILE_N is a multiple of (8, 128)-friendly 128; pad N up to it.
    tile_n = min(tile_n_max, _round_up(max(n, 1), 128))
    n_pad = _round_up(max(n, 1), tile_n)
    num_tiles = n_pad // tile_n

    # Per-row graph id (lane-major (1, N_pad) layout so no in-kernel transpose is needed).
    row = jnp.arange(n_pad, dtype=jnp.int32)
    bounds = jnp.cumsum(sizes)
    seg_ids = jnp.searchsorted(bounds, row, side="right").astype(jnp.int32)
    seg_ids = jnp.where(row < n, seg_ids, -1).reshape(1, n_pad)

    feat_p = jnp.pad(feat, ((0, n_pad - n), (0, 0)))
    w_col = w.reshape(d, 1).astype(feat.dtype)            # weight as a (D, 1) column
    counts = sizes.astype(jnp.float32).reshape(b, 1)

    kernel = functools.partial(_attentive_reduce_kernel, reducer=reducer)

    grid_spec = pltpu.PrefetchScalarGridSpec(
        num_scalar_prefetch=0,
        grid=(num_tiles,),
        in_specs=[
            pl.BlockSpec((tile_n, d), lambda t: (t, 0)),   # feat rows: each DMA'd once
            pl.BlockSpec((1, tile_n), lambda t: (0, t)),   # segment ids (lane-major)
            pl.BlockSpec((d, 1), lambda t: (0, 0)),        # weight column (resident)
            pl.BlockSpec((b, 1), lambda t: (0, 0)),        # per-graph sizes (resident)
        ],
        out_specs=pl.BlockSpec((b, d), lambda t: (0, 0)),  # resident (B, D) output
        scratch_shapes=[
            pltpu.VMEM((b, d), jnp.float32),               # weighted-sum accumulator
            pltpu.VMEM((b, 1), jnp.float32),               # softmax denominator
        ],
    )

    itemsize = int(jnp.dtype(feat.dtype).itemsize)
    cost = pl.CostEstimate(
        flops=int(2 * n_pad * d + 2 * b * n_pad * d + 2 * b * n_pad),
        transcendentals=int(2 * n_pad),
        bytes_accessed=int((n_pad * d + b * d + d) * itemsize + n_pad * 4 + b * 4),
    )

    return pl.pallas_call(
        kernel,
        out_shape=jax.ShapeDtypeStruct((b, d), feat.dtype),
        grid_spec=grid_spec,
        compiler_params=pltpu.CompilerParams(
            # Single grid axis is a reduction into the resident (B, D) output.
            dimension_semantics=("arbitrary",)),
        cost_estimate=cost,
    )(feat_p, seg_ids, w_col, counts)


def _reference(feat, sizes, w, reducer="sum"):
    """Pure-JAX reference matching the PyTorch forward."""
    s = jax.nn.sigmoid(feat @ w.T)                         # (N, 1)
    outs = []
    start = 0
    for sz in list(sizes):
        sz = int(sz)
        seg_s = s[start:start + sz]
        seg_a = jax.nn.softmax(seg_s, axis=0)
        seg = jnp.sum(feat[start:start + sz] * seg_a, axis=0)
        if reducer == "mean":
            seg = seg / sz
        outs.append(seg)
        start += sz
    return jnp.stack(outs, axis=0)


if __name__ == "__main__":
    key = jax.random.PRNGKey(0)
    k_feat, k_w = jax.random.split(key)

    B = 4
    D = 128                                               # hidden size (lane-dense)
    sizes = jnp.array([10, 6, 1, 13], dtype=jnp.int32)    # per-graph node counts
    N = int(sizes.sum())                                  # total nodes = 30

    feat = jax.random.normal(k_feat, (N, D), dtype=jnp.float32)
    # nn.Linear(in_size, 1, bias=False).weight has shape (1, in_size)
    w = jax.random.normal(k_w, (1, D), dtype=jnp.float32) * 0.1

    for reducer in ("sum", "mean"):
        out = attentive_reduce(feat, sizes, w, reducer=reducer)
        out = jax.block_until_ready(out)
        ref = _reference(feat, sizes, w, reducer=reducer)
        assert out.shape == (B, D)
        assert jnp.allclose(out, ref, atol=1e-4, rtol=1e-4), f"mismatch ({reducer})"

    print("KERNEL_OK")
</pallas_src>

<mosaic_0001>
module attributes {stable_mosaic.version = 11 : i64} {
  func.func @_attentive_reduce_kernel(%arg0: i32, %arg1: memref<128x128xf32, #tpu.memory_space<vmem>>, %arg2: memref<1x128xi32, #tpu.memory_space<vmem>>, %arg3: memref<128x1xf32, #tpu.memory_space<vmem>>, %arg4: memref<4x1xf32, #tpu.memory_space<vmem>>, %arg5: memref<4x128xf32, #tpu.memory_space<vmem>>, %arg6: memref<4x128xf32, #tpu.memory_space<vmem>>, %arg7: memref<4x1xf32, #tpu.memory_space<vmem>>) attributes {dimension_semantics = [#tpu.dimension_semantics<arbitrary>], iteration_bounds = array<i64: 1>, scalar_prefetch = 0 : i64, scratch_operands = 2 : i64, tpu.core_type = #tpu.core_type<tc>, window_params = [{transform_indices = @transform_0, window_bounds = array<i64: 128, 128>}, {transform_indices = @transform_1, window_bounds = array<i64: 1, 128>}, {pipeline_mode = #tpu.pipeline_mode<synchronous>, transform_indices = @transform_2, window_bounds = array<i64: 128, 1>}, {pipeline_mode = #tpu.pipeline_mode<synchronous>, transform_indices = @transform_3, window_bounds = array<i64: 4, 1>}, {pipeline_mode = #tpu.pipeline_mode<synchronous>, transform_indices = @transform_4, window_bounds = array<i64: 4, 128>}]} {
    %c0_i32 = arith.constant 0 : i32
    %0 = arith.cmpi eq, %arg0, %c0_i32 : i32
    %1 = arith.extui %0 : i1 to i32
    %c0_i32_0 = arith.constant 0 : i32
    %2 = arith.cmpi ne, %1, %c0_i32_0 : i32
    scf.if %2 {
      %cst_19 = arith.constant 0.000000e+00 : f32
      %31 = vector.broadcast %cst_19 : f32 to vector<4x128xf32>
      %c0_20 = arith.constant 0 : index
      %c0_21 = arith.constant 0 : index
      %32 = vector.load %arg6[%c0_20, %c0_21] : memref<4x128xf32, #tpu.memory_space<vmem>>, vector<4x128xf32>
      tpu.vector_store %arg6[%c0_20, %c0_21], %31 {strides = array<i32>} : memref<4x128xf32, #tpu.memory_space<vmem>>, vector<4x128xf32>,
      %cst_22 = arith.constant 0.000000e+00 : f32
      %33 = vector.broadcast %cst_22 : f32 to vector<4x1xf32>
      %c0_23 = arith.constant 0 : index
      %c0_24 = arith.constant 0 : index
      %34 = vector.load %arg7[%c0_23, %c0_24] : memref<4x1xf32, #tpu.memory_space<vmem>>, vector<4x1xf32>
      tpu.vector_store %arg7[%c0_23, %c0_24], %33 {strides = array<i32>} : memref<4x1xf32, #tpu.memory_space<vmem>>, vector<4x1xf32>,
    } else {
    }
    %c0 = arith.constant 0 : index
    %c0_1 = arith.constant 0 : index
    %3 = vector.load %arg1[%c0, %c0_1] : memref<128x128xf32, #tpu.memory_space<vmem>>, vector<128x128xf32>
    %c0_2 = arith.constant 0 : index
    %c0_3 = arith.constant 0 : index
    %4 = vector.load %arg3[%c0_2, %c0_3] : memref<128x1xf32, #tpu.memory_space<vmem>>, vector<128x1xf32>
    %cst = arith.constant dense<0.000000e+00> : vector<128x1xf32>
    %5 = tpu.matmul %3, %4, %cst {dimension_numbers = #tpu.dot_dimension_numbers<[1], [0], [0], [1], [0, 0, 1, 1], [], []>} : vector<128x128xf32>, vector<128x1xf32>, vector<128x1xf32> -> vector<128x1xf32>
    %6 = arith.negf %5 : vector<128x1xf32>
    %7 = math.exp %6 : vector<128x1xf32>
    %cst_4 = arith.constant 1.000000e+00 : f32
    %8 = vector.broadcast %cst_4 : f32 to vector<128x1xf32>
    %9 = arith.addf %8, %7 : vector<128x1xf32>
    %10 = arith.divf %8, %9 : vector<128x1xf32>
    %11 = math.exp %10 : vector<128x1xf32>
    %12 = tpu.iota {dimensions = array<i32: 0>} : vector<4x128xi32>
    %c0_5 = arith.constant 0 : index
    %c0_6 = arith.constant 0 : index
    %13 = vector.load %arg2[%c0_5, %c0_6] : memref<1x128xi32, #tpu.memory_space<vmem>>, vector<1x128xi32>
    %14 = vector.broadcast %13 : vector<1x128xi32> to vector<4x128xi32>
    %15 = arith.cmpi eq, %14, %12 : vector<4x128xi32>
    %16 = arith.extui %15 : vector<4x128xi1> to vector<4x128xi32>
    %17 = arith.sitofp %16 : vector<4x128xi32> to vector<4x128xf32>
    %18 = vector.broadcast %11 : vector<128x1xf32> to vector<128x128xf32>
    %19 = arith.mulf %3, %18 : vector<128x128xf32>
    %c0_7 = arith.constant 0 : index
    %c0_8 = arith.constant 0 : index
    %20 = vector.load %arg6[%c0_7, %c0_8] : memref<4x128xf32, #tpu.memory_space<vmem>>, vector<4x128xf32>
    %cst_9 = arith.constant dense<0.000000e+00> : vector<4x128xf32>
    %21 = tpu.matmul %17, %19, %cst_9 {dimension_numbers = #tpu.dot_dimension_numbers<[1], [0], [0], [1], [0, 0, 1, 1], [], []>} : vector<4x128xf32>, vector<128x128xf32>, vector<4x128xf32> -> vector<4x128xf32>
    %22 = arith.addf %20, %21 : vector<4x128xf32>
    %c0_10 = arith.constant 0 : index
    %c0_11 = arith.constant 0 : index
    %23 = vector.load %arg6[%c0_10, %c0_11] : memref<4x128xf32, #tpu.memory_space<vmem>>, vector<4x128xf32>
    tpu.vector_store %arg6[%c0_10, %c0_11], %22 {strides = array<i32>} : memref<4x128xf32, #tpu.memory_space<vmem>>, vector<4x128xf32>,
    %c0_12 = arith.constant 0 : index
    %c0_13 = arith.constant 0 : index
    %24 = vector.load %arg7[%c0_12, %c0_13] : memref<4x1xf32, #tpu.memory_space<vmem>>, vector<4x1xf32>
    %cst_14 = arith.constant dense<0.000000e+00> : vector<4x1xf32>
    %25 = tpu.matmul %17, %11, %cst_14 {dimension_numbers = #tpu.dot_dimension_numbers<[1], [0], [0], [1], [0, 0, 1, 1], [], []>} : vector<4x128xf32>, vector<128x1xf32>, vector<4x1xf32> -> vector<4x1xf32>
    %26 = arith.addf %24, %25 : vector<4x1xf32>
    %c0_15 = arith.constant 0 : index
    %c0_16 = arith.constant 0 : index
    %27 = vector.load %arg7[%c0_15, %c0_16] : memref<4x1xf32, #tpu.memory_space<vmem>>, vector<4x1xf32>
    tpu.vector_store %arg7[%c0_15, %c0_16], %26 {strides = array<i32>} : memref<4x1xf32, #tpu.memory_space<vmem>>, vector<4x1xf32>,
    %c0_i32_17 = arith.constant 0 : i32
    %28 = arith.cmpi eq, %arg0, %c0_i32_17 : i32
    %29 = arith.extui %28 : i1 to i32
    %c0_i32_18 = arith.constant 0 : i32
    %30 = arith.cmpi ne, %29, %c0_i32_18 : i32
    scf.if %30 {
      %c0_19 = arith.constant 0 : index
      %c0_20 = arith.constant 0 : index
      %31 = vector.load %arg7[%c0_19, %c0_20] : memref<4x1xf32, #tpu.memory_space<vmem>>, vector<4x1xf32>
      %cst_21 = arith.constant 0.000000e+00 : f32
      %32 = vector.broadcast %cst_21 : f32 to vector<4x1xf32>
      %33 = arith.cmpf ogt, %31, %32 : vector<4x1xf32>
      %34 = tpu.reciprocal %31 : vector<4x1xf32> -> vector<4x1xf32>
      %cst_22 = arith.constant 0.000000e+00 : f32
      %35 = vector.broadcast %cst_22 : f32 to vector<4x1xf32>
      %36 = arith.select %33, %34, %35 : vector<4x1xi1>, vector<4x1xf32>
      %c0_23 = arith.constant 0 : index
      %c0_24 = arith.constant 0 : index
      %37 = vector.load %arg6[%c0_23, %c0_24] : memref<4x128xf32, #tpu.memory_space<vmem>>, vector<4x128xf32>
      %38 = vector.broadcast %36 : vector<4x1xf32> to vector<4x128xf32>
      %39 = arith.mulf %37, %38 : vector<4x128xf32>
      %c0_25 = arith.constant 0 : index
      %c0_26 = arith.constant 0 : index
      %40 = vector.load %arg5[%c0_25, %c0_26] : memref<4x128xf32, #tpu.memory_space<vmem>>, vector<4x128xf32>
      tpu.vector_store %arg5[%c0_25, %c0_26], %39 {strides = array<i32>} : memref<4x128xf32, #tpu.memory_space<vmem>>, vector<4x128xf32>,
    } else {
    }
    return
  }
  func.func @transform_0(%arg0: i32) -> (i32, i32) {
    %c0_i32 = arith.constant 0 : i32
    %c0_i32_0 = arith.constant 0 : i32
    return %arg0, %c0_i32 : i32, i32
  }
  func.func @transform_1(%arg0: i32) -> (i32, i32) {
    %c0_i32 = arith.constant 0 : i32
    %c0_i32_0 = arith.constant 0 : i32
    return %c0_i32, %arg0 : i32, i32
  }
  func.func @transform_2(%arg0: i32) -> (i32, i32) {
    %c0_i32 = arith.constant 0 : i32
    %c0_i32_0 = arith.constant 0 : i32
    %c0_i32_1 = arith.constant 0 : i32
    return %c0_i32, %c0_i32_0 : i32, i32
  }
  func.func @transform_3(%arg0: i32) -> (i32, i32) {
    %c0_i32 = arith.constant 0 : i32
    %c0_i32_0 = arith.constant 0 : i32
    %c0_i32_1 = arith.constant 0 : i32
    return %c0_i32, %c0_i32_0 : i32, i32
  }
  func.func @transform_4(%arg0: i32) -> (i32, i32) {
    %c0_i32 = arith.constant 0 : i32
    %c0_i32_0 = arith.constant 0 : i32
    %c0_i32_1 = arith.constant 0 : i32
    return %c0_i32, %c0_i32_0 : i32, i32
  }
}

</mosaic_0001>

<llo_original>
// kernel: tpu_custom_call.1
$region0: #{tpu_custom_call.1}
  #allocation0 [shape = 'u32[]', space=smem, size = 0x4, offset = 0x4, fixed_abs, tag = 'smem constant byte address 0x4 - core index']
  #allocation1 [shape = 'u32[144,128]{1,0:T(1,128)}', space=vmem, size = 0x12000, scoped, tag = 'internal scratch']
  #allocation2 [shape = 'f32[4,128]{1,0:T(4,128)}', space=vmem, size = 0x800, scoped, tag = 'scratch operand']
  #allocation3 [shape = 'f32[4,1]{1,0:T(4,128)}', space=vmem, size = 0x800, scoped, tag = 'scratch operand']
  %s0 = inlined_call_operand.vmem [shape: f32[128,128], index: 0, kind: input, shape index: {}]
  %s1 = inlined_call_operand.vmem [shape: s32[1,128], index: 1, kind: input, shape index: {}]
  %s2 = inlined_call_operand.vmem [shape: f32[128,1], index: 2, kind: input, shape index: {}]
  %s3 = inlined_call_operand.vmem [shape: f32[4,1], index: 3, kind: input, shape index: {}]
  %s4 = inlined_call_operand.hbm [shape: f32[4,128], index: 4, kind: output, shape index: {}]
  %s5 = sld [smem:[#allocation0]]
  $region34: #{tpu_custom_call.1} parent=0
    _
  %s7 = ssub.s32 1, %s5
  %s8 = scalar_select 0, %s7, %s5
  $region1: #{tpu_custom_call.1} parent=0
    #allocation4 [shape = 'u8[2048]{0}', space=vmem, size = 0x800, scoped, tag = 'output window, operand 0, single buffered']
    #allocation5 [shape = 's32[1]{0}', space=sflag, size = 0x4, scoped, tag = 'scoped memory for tpu_custom_call.1']
    %9 = vsyncpa [#allocation5], 0
    // Predicated region
    $region2: #{tpu_custom_call.1} parent=1 // pred_check
      _
    $region3: #{tpu_custom_call.1} parent=1 // pred_check_branch
      %11 = sbr.rel (0) target = $region5
    $region4: #{tpu_custom_call.1} parent=1 // pred_region
      _
    $region5: #{tpu_custom_call.1} parent=1 // pred_fallthru
      _
    // Predicated region
    $region6: #{tpu_custom_call.1} parent=1 // pred_check
      _
    $region7: #{tpu_custom_call.1} parent=1 // pred_check_branch
      %13 = sbr.rel (0) target = $region9
    $region8: #{tpu_custom_call.1} parent=1 // pred_region
      _
    $region9: #{tpu_custom_call.1} parent=1 // pred_fallthru
      _
    // Predicated region
    $region10: #{tpu_custom_call.1} parent=1 // pred_check
      _
    $region11: #{tpu_custom_call.1} parent=1 // pred_check_branch
      %15 = sbr.rel (0) target = $region13
    $region12: #{tpu_custom_call.1} parent=1 // pred_region
      _
    $region13: #{tpu_custom_call.1} parent=1 // pred_fallthru
      _
    // Predicated region
    $region14: #{tpu_custom_call.1} parent=1 // pred_check
      _
    $region15: #{tpu_custom_call.1} parent=1 // pred_check_branch
      %17 = sbr.rel (0) target = $region17
    $region16: #{tpu_custom_call.1} parent=1 // pred_region
      _
    $region17: #{tpu_custom_call.1} parent=1 // pred_fallthru
      _
    %p18 = scmp.eq.s32.totalorder 0, 0
    // Predicated region
    $region18: #{tpu_custom_call.1} parent=1 // pred_check
      %p19 = pneg %p18
    $region19: #{tpu_custom_call.1} parent=1 // pred_check_branch
      %21 = sbr.rel (%p19) target = $region21
    $region20: #{tpu_custom_call.1} parent=1 // pred_region
      %22 = vst [vmem:[#allocation2] sm:$0xf] 0.0
      %vm23 = vcmask 3072
      %24 = vst.msk [vmem:[#allocation3] sm:$0xf] %vm23, 0.0
    $region21: #{tpu_custom_call.1} parent=1 // pred_fallthru
      _
    %v25 = vld [vmem:[%s0] sm:$0xff]
    %v26 = vld [vmem:[%s0 + $0x8] sm:$0xff]
    %v27 = vld [vmem:[%s0 + $0x10] sm:$0xff]
    %v28 = vld [vmem:[%s0 + $0x18] sm:$0xff]
    %v29 = vld [vmem:[%s0 + $0x20] sm:$0xff]
    %v30 = vld [vmem:[%s0 + $0x28] sm:$0xff]
    %v31 = vld [vmem:[%s0 + $0x30] sm:$0xff]
    %v32 = vld [vmem:[%s0 + $0x38] sm:$0xff]
    %v33 = vld [vmem:[%s0 + $0x40] sm:$0xff]
    %v34 = vld [vmem:[%s0 + $0x48] sm:$0xff]
    %v35 = vld [vmem:[%s0 + $0x50] sm:$0xff]
    %v36 = vld [vmem:[%s0 + $0x58] sm:$0xff]
    %v37 = vld [vmem:[%s0 + $0x60] sm:$0xff]
    %v38 = vld [vmem:[%s0 + $0x68] sm:$0xff]
    %v39 = vld [vmem:[%s0 + $0x70] sm:$0xff]
    %v40 = vld [vmem:[%s0 + $0x78] sm:$0xff]
    %v41 = vld [vmem:[%s2] sm:$0xff]
    %v42 = vld [vmem:[%s2 + $0x8] sm:$0xff]
    %v43 = vld [vmem:[%s2 + $0x10] sm:$0xff]
    %v44 = vld [vmem:[%s2 + $0x18] sm:$0xff]
    %v45 = vld [vmem:[%s2 + $0x20] sm:$0xff]
    %v46 = vld [vmem:[%s2 + $0x28] sm:$0xff]
    %v47 = vld [vmem:[%s2 + $0x30] sm:$0xff]
    %v48 = vld [vmem:[%s2 + $0x38] sm:$0xff]
    %v49 = vld [vmem:[%s2 + $0x40] sm:$0xff]
    %v50 = vld [vmem:[%s2 + $0x48] sm:$0xff]
    %v51 = vld [vmem:[%s2 + $0x50] sm:$0xff]
    %v52 = vld [vmem:[%s2 + $0x58] sm:$0xff]
    %v53 = vld [vmem:[%s2 + $0x60] sm:$0xff]
    %v54 = vld [vmem:[%s2 + $0x68] sm:$0xff]
    %v55 = vld [vmem:[%s2 + $0x70] sm:$0xff]
    %v56 = vld [vmem:[%s2 + $0x78] sm:$0xff]
    %57 = vmatprep.subr.mxu0 0.0
    %58 = vmatpush1.msra.mxu0 %v56
    %59 = vmatprep.subr.mxu0 0.0
    %60 = vmatpush1.msra.mxu0 %v55
    %61 = vmatprep.subr.mxu0 0.0
    %62 = vmatpush1.msra.mxu0 %v54
    %63 = vmatprep.subr.mxu0 0.0
    %64 = vmatpush1.msra.mxu0 %v53
    %65 = vmatprep.subr.mxu0 0.0
    %66 = vmatpush1.msra.mxu0 %v52
    %67 = vmatprep.subr.mxu0 0.0
    %68 = vmatpush1.msra.mxu0 %v51
    %69 = vmatprep.subr.mxu0 0.0
    %70 = vmatpush1.msra.mxu0 %v50
    %71 = vmatprep.subr.mxu0 0.0
    %72 = vmatpush1.msra.mxu0 %v49
    %73 = vmatprep.subr.mxu0 0.0
    %74 = vmatpush1.msra.mxu0 %v48
    %75 = vmatprep.subr.mxu0 0.0
    %76 = vmatpush1.msra.mxu0 %v47
    %77 = vmatprep.subr.mxu0 0.0
    %78 = vmatpush1.msra.mxu0 %v46
    %79 = vmatprep.subr.mxu0 0.0
    %80 = vmatpush1.msra.mxu0 %v45
    %81 = vmatprep.subr.mxu0 0.0
    %82 = vmatpush1.msra.mxu0 %v44
    %83 = vmatprep.subr.mxu0 0.0
    %84 = vmatpush1.msra.mxu0 %v43
    %85 = vmatprep.subr.mxu0 0.0
    %86 = vmatpush1.msra.mxu0 %v42
    %87 = vmatprep.subr.mxu0 0.0
    %88 = vmatpush1.msra.mxu0 %v41
    %89 = vmatprep.subr.mxu0 0.0
    %90 = vmatpush2.msra.mxu0 0.0
    %91 = vmatprep.subr.mxu0 0.0
    %92 = vmatpush2.msra.mxu0 0.0
    %93 = vmatprep.subr.mxu0 0.0
    %94 = vmatpush2.msra.mxu0 0.0
    %95 = vmatprep.subr.mxu0 0.0
    %96 = vmatpush2.msra.mxu0 0.0
    %97 = vmatprep.subr.mxu0 0.0
    %98 = vmatpush2.msra.mxu0 0.0
    %99 = vmatprep.subr.mxu0 0.0
    %100 = vmatpush2.msra.mxu0 0.0
    %101 = vmatprep.subr.mxu0 0.0
    %102 = vmatpush2.msra.mxu0 0.0
    %103 = vmatprep.subr.mxu0 0.0
    %104 = vmatpush2.msra.mxu0 0.0
    %105 = vmatprep.subr.mxu0 0.0
    %106 = vmatpush2.msra.mxu0 0.0
    %107 = vmatprep.subr.mxu0 0.0
    %108 = vmatpush2.msra.mxu0 0.0
    %109 = vmatprep.subr.mxu0 0.0
    %110 = vmatpush2.msra.mxu0 0.0
    %111 = vmatprep.subr.mxu0 0.0
    %112 = vmatpush2.msra.mxu0 0.0
    %113 = vmatprep.subr.mxu0 0.0
    %114 = vmatpush2.msra.mxu0 0.0
    %115 = vmatprep.subr.mxu0 0.0
    %116 = vmatpush2.msra.mxu0 0.0
    %117 = vmatprep.subr.mxu0 0.0
    %118 = vmatpush2.msra.mxu0 0.0
    %119 = vmatprep.subr.mxu0 0.0
    %120 = vmatpush2.msra.mxu0 0.0
    %121 = vmatprep.mubr.f32.mxu0 0.0
    %122 = vmatmul.mubr.f32.gmra.mxu0 %v25
    %v123 = vpop.f32.mrf.mxu0
    %v124 = vadd.f32 0.0, %v123
    %v125 = vpop.f32.mrf.mxu0
    %126 = vmatprep.mubr.f32.mxu0 0.0
    %127 = vmatmul.mubr.f32.gmra.mxu0 %v26
    %v128 = vpop.f32.mrf.mxu0
    %v129 = vadd.f32 0.0, %v128
    %v130 = vpop.f32.mrf.mxu0
    %131 = vmatprep.mubr.f32.mxu0 0.0
    %132 = vmatmul.mubr.f32.gmra.mxu0 %v27
    %v133 = vpop.f32.mrf.mxu0
    %v134 = vadd.f32 0.0, %v133
    %v135 = vpop.f32.mrf.mxu0
    %136 = vmatprep.mubr.f32.mxu0 0.0
    %137 = vmatmul.mubr.f32.gmra.mxu0 %v28
    %v138 = vpop.f32.mrf.mxu0
    %v139 = vadd.f32 0.0, %v138
    %v140 = vpop.f32.mrf.mxu0
    %141 = vmatprep.mubr.f32.mxu0 0.0
    %142 = vmatmul.mubr.f32.gmra.mxu0 %v29
    %v143 = vpop.f32.mrf.mxu0
    %v144 = vadd.f32 0.0, %v143
    %v145 = vpop.f32.mrf.mxu0
    %146 = vmatprep.mubr.f32.mxu0 0.0
    %147 = vmatmul.mubr.f32.gmra.mxu0 %v30
    %v148 = vpop.f32.mrf.mxu0
    %v149 = vadd.f32 0.0, %v148
    %v150 = vpop.f32.mrf.mxu0
    %151 = vmatprep.mubr.f32.mxu0 0.0
    %152 = vmatmul.mubr.f32.gmra.mxu0 %v31
    %v153 = vpop.f32.mrf.mxu0
    %v154 = vadd.f32 0.0, %v153
    %v155 = vpop.f32.mrf.mxu0
    %156 = vmatprep.mubr.f32.mxu0 0.0
    %157 = vmatmul.mubr.f32.gmra.mxu0 %v32
    %v158 = vpop.f32.mrf.mxu0
    %v159 = vadd.f32 0.0, %v158
    %v160 = vpop.f32.mrf.mxu0
    %161 = vmatprep.mubr.f32.mxu0 0.0
    %162 = vmatmul.mubr.f32.gmra.mxu0 %v33
    %v163 = vpop.f32.mrf.mxu0
    %v164 = vadd.f32 0.0, %v163
    %v165 = vpop.f32.mrf.mxu0
    %166 = vmatprep.mubr.f32.mxu0 0.0
    %167 = vmatmul.mubr.f32.gmra.mxu0 %v34
    %v168 = vpop.f32.mrf.mxu0
    %v169 = vadd.f32 0.0, %v168
    %v170 = vpop.f32.mrf.mxu0
    %171 = vmatprep.mubr.f32.mxu0 0.0
    %172 = vmatmul.mubr.f32.gmra.mxu0 %v35
    %v173 = vpop.f32.mrf.mxu0
    %v174 = vadd.f32 0.0, %v173
    %v175 = vpop.f32.mrf.mxu0
    %176 = vmatprep.mubr.f32.mxu0 0.0
    %177 = vmatmul.mubr.f32.gmra.mxu0 %v36
    %v178 = vpop.f32.mrf.mxu0
    %v179 = vadd.f32 0.0, %v178
    %v180 = vpop.f32.mrf.mxu0
    %181 = vmatprep.mubr.f32.mxu0 0.0
    %182 = vmatmul.mubr.f32.gmra.mxu0 %v37
    %v183 = vpop.f32.mrf.mxu0
    %v184 = vadd.f32 0.0, %v183
    %v185 = vpop.f32.mrf.mxu0
    %186 = vmatprep.mubr.f32.mxu0 0.0
    %187 = vmatmul.mubr.f32.gmra.mxu0 %v38
    %v188 = vpop.f32.mrf.mxu0
    %v189 = vadd.f32 0.0, %v188
    %v190 = vpop.f32.mrf.mxu0
    %191 = vmatprep.mubr.f32.mxu0 0.0
    %192 = vmatmul.mubr.f32.gmra.mxu0 %v39
    %v193 = vpop.f32.mrf.mxu0
    %v194 = vadd.f32 0.0, %v193
    %v195 = vpop.f32.mrf.mxu0
    %196 = vmatprep.mubr.f32.mxu0 0.0
    %197 = vmatmul.mubr.f32.gmra.mxu0 %v40
    %v198 = vpop.f32.mrf.mxu0
    %v199 = vadd.f32 0.0, %v198
    %v200 = vpop.f32.mrf.mxu0
    %201 = vdwg.mxu0
    %v202 = vxor.u32 %v124, 2147483648
    %v203 = vxor.u32 %v129, 2147483648
    %v204 = vxor.u32 %v134, 2147483648
    %v205 = vxor.u32 %v139, 2147483648
    %v206 = vxor.u32 %v144, 2147483648
    %v207 = vxor.u32 %v149, 2147483648
    %v208 = vxor.u32 %v154, 2147483648
    %v209 = vxor.u32 %v159, 2147483648
    %v210 = vxor.u32 %v164, 2147483648
    %v211 = vxor.u32 %v169, 2147483648
    %v212 = vxor.u32 %v174, 2147483648
    %v213 = vxor.u32 %v179, 2147483648
    %v214 = vxor.u32 %v184, 2147483648
    %v215 = vxor.u32 %v189, 2147483648
    %v216 = vxor.u32 %v194, 2147483648
    %v217 = vxor.u32 %v199, 2147483648
    %v218 = vmul.f32 %v202, 1.442695
    %v219 = vpow.pop %v218
    %v220 = vmul.f32 %v203, 1.442695
    %v221 = vpow.pop %v220
    %v222 = vmul.f32 %v204, 1.442695
    %v223 = vpow.pop %v222
    %v224 = vmul.f32 %v205, 1.442695
    %v225 = vpow.pop %v224
    %v226 = vmul.f32 %v206, 1.442695
    %v227 = vpow.pop %v226
    %v228 = vmul.f32 %v207, 1.442695
    %v229 = vpow.pop %v228
    %v230 = vmul.f32 %v208, 1.442695
    %v231 = vpow.pop %v230
    %v232 = vmul.f32 %v209, 1.442695
    %v233 = vpow.pop %v232
    %v234 = vmul.f32 %v210, 1.442695
    %v235 = vpow.pop %v234
    %v236 = vmul.f32 %v211, 1.442695
    %v237 = vpow.pop %v236
    %v238 = vmul.f32 %v212, 1.442695
    %v239 = vpow.pop %v238
    %v240 = vmul.f32 %v213, 1.442695
    %v241 = vpow.pop %v240
    %v242 = vmul.f32 %v214, 1.442695
    %v243 = vpow.pop %v242
    %v244 = vmul.f32 %v215, 1.442695
    %v245 = vpow.pop %v244
    %v246 = vmul.f32 %v216, 1.442695
    %v247 = vpow.pop %v246
    %v248 = vmul.f32 %v217, 1.442695
    %v249 = vpow.pop %v248
    %v250 = vadd.f32 %v219, 1.0
    %v251 = vadd.f32 %v221, 1.0
    %v252 = vadd.f32 %v223, 1.0
    %v253 = vadd.f32 %v225, 1.0
    %v254 = vadd.f32 %v227, 1.0
    %v255 = vadd.f32 %v229, 1.0
    %v256 = vadd.f32 %v231, 1.0
    %v257 = vadd.f32 %v233, 1.0
    %v258 = vadd.f32 %v235, 1.0
    %v259 = vadd.f32 %v237, 1.0
    %v260 = vadd.f32 %v239, 1.0
    %v261 = vadd.f32 %v241, 1.0
    %v262 = vadd.f32 %v243, 1.0
    %v263 = vadd.f32 %v245, 1.0
    %v264 = vadd.f32 %v247, 1.0
    %v265 = vadd.f32 %v249, 1.0
    %v266 = vrcp.pop %v250
    %v267 = vmul.f32 1.0, %v266
    %v268 = vrcp.pop %v251
    %v269 = vmul.f32 1.0, %v268
    %v270 = vrcp.pop %v252
    %v271 = vmul.f32 1.0, %v270
    %v272 = vrcp.pop %v253
    %v273 = vmul.f32 1.0, %v272
    %v274 = vrcp.pop %v254
    %v275 = vmul.f32 1.0, %v274
    %v276 = vrcp.pop %v255
    %v277 = vmul.f32 1.0, %v276
    %v278 = vrcp.pop %v256
    %v279 = vmul.f32 1.0, %v278
    %v280 = vrcp.pop %v257
    %v281 = vmul.f32 1.0, %v280
    %v282 = vrcp.pop %v258
    %v283 = vmul.f32 1.0, %v282
    %v284 = vrcp.pop %v259
    %v285 = vmul.f32 1.0, %v284
    %v286 = vrcp.pop %v260
    %v287 = vmul.f32 1.0, %v286
    %v288 = vrcp.pop %v261
    %v289 = vmul.f32 1.0, %v288
    %v290 = vrcp.pop %v262
    %v291 = vmul.f32 1.0, %v290
    %v292 = vrcp.pop %v263
    %v293 = vmul.f32 1.0, %v292
    %v294 = vrcp.pop %v264
    %v295 = vmul.f32 1.0, %v294
    %v296 = vrcp.pop %v265
    %v297 = vmul.f32 1.0, %v296
    %v298 = vmul.f32 %v267, 1.442695
    %v299 = vpow.pop %v298
    %v300 = vmul.f32 %v269, 1.442695
    %v301 = vpow.pop %v300
    %v302 = vmul.f32 %v271, 1.442695
    %v303 = vpow.pop %v302
    %v304 = vmul.f32 %v273, 1.442695
    %v305 = vpow.pop %v304
    %v306 = vmul.f32 %v275, 1.442695
    %v307 = vpow.pop %v306
    %v308 = vmul.f32 %v277, 1.442695
    %v309 = vpow.pop %v308
    %v310 = vmul.f32 %v279, 1.442695
    %v311 = vpow.pop %v310
    %v312 = vmul.f32 %v281, 1.442695
    %v313 = vpow.pop %v312
    %v314 = vmul.f32 %v283, 1.442695
    %v315 = vpow.pop %v314
    %v316 = vmul.f32 %v285, 1.442695
    %v317 = vpow.pop %v316
    %v318 = vmul.f32 %v287, 1.442695
    %v319 = vpow.pop %v318
    %v320 = vmul.f32 %v289, 1.442695
    %v321 = vpow.pop %v320
    %v322 = vmul.f32 %v291, 1.442695
    %v323 = vpow.pop %v322
    %v324 = vmul.f32 %v293, 1.442695
    %v325 = vpow.pop %v324
    %v326 = vmul.f32 %v295, 1.442695
    %v327 = vpow.pop %v326
    %v328 = vmul.f32 %v297, 1.442695
    %v329 = vpow.pop %v328
    %v330 = vlaneseq
    %v331 = vshrl.u32 %v330, 7
    %v332 = vld [vmem:[%s1] sm:$0x1]
    %v333 = vlaneseq
    %v334 = vshrl.u32 %v333, 7
    %v335 = vsub.s32 0, %v334
    %v336 = vrot.slane %v332, %v335
    %vm337 = vcmp.eq.s32.totalorder %v336, %v331
    %v338 = vsel %vm337, 1, 0
    %v339 = vcvt.s32.f32 %v338
    %341 = vset.pattern.permute.xlu0 0
    %342 = vperm.xlu0 %341, %v299
    %v343 = vpop.permute.xlu0 %342
    %346 = vset.pattern.permute.xlu0 0
    %347 = vperm.xlu0 %346, %v301
    %v348 = vpop.permute.xlu0 %347
    %351 = vset.pattern.permute.xlu0 0
    %352 = vperm.xlu0 %351, %v303
    %v353 = vpop.permute.xlu0 %352
    %356 = vset.pattern.permute.xlu0 0
    %357 = vperm.xlu0 %356, %v305
    %v358 = vpop.permute.xlu0 %357
    %361 = vset.pattern.permute.xlu0 0
    %362 = vperm.xlu0 %361, %v307
    %v363 = vpop.permute.xlu0 %362
    %366 = vset.pattern.permute.xlu0 0
    %367 = vperm.xlu0 %366, %v309
    %v368 = vpop.permute.xlu0 %367
    %371 = vset.pattern.permute.xlu0 0
    %372 = vperm.xlu0 %371, %v311
    %v373 = vpop.permute.xlu0 %372
    %376 = vset.pattern.permute.xlu0 0
    %377 = vperm.xlu0 %376, %v313
    %v378 = vpop.permute.xlu0 %377
    %381 = vset.pattern.permute.xlu0 0
    %382 = vperm.xlu0 %381, %v315
    %v383 = vpop.permute.xlu0 %382
    %386 = vset.pattern.permute.xlu0 0
    %387 = vperm.xlu0 %386, %v317
    %v388 = vpop.permute.xlu0 %387
    %391 = vset.pattern.permute.xlu0 0
    %392 = vperm.xlu0 %391, %v319
    %v393 = vpop.permute.xlu0 %392
    %396 = vset.pattern.permute.xlu0 0
    %397 = vperm.xlu0 %396, %v321
    %v398 = vpop.permute.xlu0 %397
    %401 = vset.pattern.permute.xlu0 0
    %402 = vperm.xlu0 %401, %v323
    %v403 = vpop.permute.xlu0 %402
    %406 = vset.pattern.permute.xlu0 0
    %407 = vperm.xlu0 %406, %v325
    %v408 = vpop.permute.xlu0 %407
    %411 = vset.pattern.permute.xlu0 0
    %412 = vperm.xlu0 %411, %v327
    %v413 = vpop.permute.xlu0 %412
    %416 = vset.pattern.permute.xlu0 0
    %417 = vperm.xlu0 %416, %v329
    %v418 = vpop.permute.xlu0 %417
    %v420 = vmul.f32 %v25, %v343
    %v421 = vmul.f32 %v26, %v348
    %v422 = vmul.f32 %v27, %v353
    %v423 = vmul.f32 %v28, %v358
    %v424 = vmul.f32 %v29, %v363
    %v425 = vmul.f32 %v30, %v368
    %v426 = vmul.f32 %v31, %v373
    %v427 = vmul.f32 %v32, %v378
    %v428 = vmul.f32 %v33, %v383
    %v429 = vmul.f32 %v34, %v388
    %v430 = vmul.f32 %v35, %v393
    %v431 = vmul.f32 %v36, %v398
    %v432 = vmul.f32 %v37, %v403
    %v433 = vmul.f32 %v38, %v408
    %v434 = vmul.f32 %v39, %v413
    %v435 = vmul.f32 %v40, %v418
    %v436 = vld [vmem:[#allocation2] sm:$0xf]
    %437 = vmatprep.subr.mxu0 0.0
    %438 = vmatpush1.msra.mxu0 %v435
    %439 = vmatprep.subr.mxu0 0.0
    %440 = vmatpush1.msra.mxu0 %v434
    %441 = vmatprep.subr.mxu0 0.0
    %442 = vmatpush1.msra.mxu0 %v433
    %443 = vmatprep.subr.mxu0 0.0
    %444 = vmatpush1.msra.mxu0 %v432
    %445 = vmatprep.subr.mxu0 0.0
    %446 = vmatpush1.msra.mxu0 %v431
    %447 = vmatprep.subr.mxu0 0.0
    %448 = vmatpush1.msra.mxu0 %v430
    %449 = vmatprep.subr.mxu0 0.0
    %450 = vmatpush1.msra.mxu0 %v429
    %451 = vmatprep.subr.mxu0 0.0
    %452 = vmatpush1.msra.mxu0 %v428
    %453 = vmatprep.subr.mxu0 0.0
    %454 = vmatpush1.msra.mxu0 %v427
    %455 = vmatprep.subr.mxu0 0.0
    %456 = vmatpush1.msra.mxu0 %v426
    %457 = vmatprep.subr.mxu0 0.0
    %458 = vmatpush1.msra.mxu0 %v425
    %459 = vmatprep.subr.mxu0 0.0
    %460 = vmatpush1.msra.mxu0 %v424
    %461 = vmatprep.subr.mxu0 0.0
    %462 = vmatpush1.msra.mxu0 %v423
    %463 = vmatprep.subr.mxu0 0.0
    %464 = vmatpush1.msra.mxu0 %v422
    %465 = vmatprep.subr.mxu0 0.0
    %466 = vmatpush1.msra.mxu0 %v421
    %467 = vmatprep.subr.mxu0 0.0
    %468 = vmatpush1.msra.mxu0 %v420
    %469 = vmatprep.subr.mxu0 0.0
    %470 = vmatpush2.msra.mxu0 0.0
    %471 = vmatprep.subr.mxu0 0.0
    %472 = vmatpush2.msra.mxu0 0.0
    %473 = vmatprep.subr.mxu0 0.0
    %474 = vmatpush2.msra.mxu0 0.0
    %475 = vmatprep.subr.mxu0 0.0
    %476 = vmatpush2.msra.mxu0 0.0
    %477 = vmatprep.subr.mxu0 0.0
    %478 = vmatpush2.msra.mxu0 0.0
    %479 = vmatprep.subr.mxu0 0.0
    %480 = vmatpush2.msra.mxu0 0.0
    %481 = vmatprep.subr.mxu0 0.0
    %482 = vmatpush2.msra.mxu0 0.0
    %483 = vmatprep.subr.mxu0 0.0
    %484 = vmatpush2.msra.mxu0 0.0
    %485 = vmatprep.subr.mxu0 0.0
    %486 = vmatpush2.msra.mxu0 0.0
    %487 = vmatprep.subr.mxu0 0.0
    %488 = vmatpush2.msra.mxu0 0.0
    %489 = vmatprep.subr.mxu0 0.0
    %490 = vmatpush2.msra.mxu0 0.0
    %491 = vmatprep.subr.mxu0 0.0
    %492 = vmatpush2.msra.mxu0 0.0
    %493 = vmatprep.subr.mxu0 0.0
    %494 = vmatpush2.msra.mxu0 0.0
    %495 = vmatprep.subr.mxu0 0.0
    %496 = vmatpush2.msra.mxu0 0.0
    %497 = vmatprep.subr.mxu0 0.0
    %498 = vmatpush2.msra.mxu0 0.0
    %499 = vmatprep.subr.mxu0 0.0
    %500 = vmatpush2.msra.mxu0 0.0
    %501 = vmatprep.mubr.f32.mxu0 0.0
    %502 = vmatmul.mubr.f32.gmra.mxu0 %v339
    %v503 = vpop.f32.mrf.mxu0
    %v504 = vadd.f32 0.0, %v503
    %v505 = vpop.f32.mrf.mxu0
    %506 = vdwg.mxu0
    %v507 = vadd.f32 %v436, %v504
    %508 = vst [vmem:[#allocation2] sm:$0xf] %v507
    %v509 = vld [vmem:[#allocation3] sm:$0xf]
    %510 = vmatprep.subr.mxu0 0.0
    %511 = vmatpush1.msra.mxu0 %v329
    %512 = vmatprep.subr.mxu0 0.0
    %513 = vmatpush1.msra.mxu0 %v327
    %514 = vmatprep.subr.mxu0 0.0
    %515 = vmatpush1.msra.mxu0 %v325
    %516 = vmatprep.subr.mxu0 0.0
    %517 = vmatpush1.msra.mxu0 %v323
    %518 = vmatprep.subr.mxu0 0.0
    %519 = vmatpush1.msra.mxu0 %v321
    %520 = vmatprep.subr.mxu0 0.0
    %521 = vmatpush1.msra.mxu0 %v319
    %522 = vmatprep.subr.mxu0 0.0
    %523 = vmatpush1.msra.mxu0 %v317
    %524 = vmatprep.subr.mxu0 0.0
    %525 = vmatpush1.msra.mxu0 %v315
    %526 = vmatprep.subr.mxu0 0.0
    %527 = vmatpush1.msra.mxu0 %v313
    %528 = vmatprep.subr.mxu0 0.0
    %529 = vmatpush1.msra.mxu0 %v311
    %530 = vmatprep.subr.mxu0 0.0
    %531 = vmatpush1.msra.mxu0 %v309
    %532 = vmatprep.subr.mxu0 0.0
    %533 = vmatpush1.msra.mxu0 %v307
    %534 = vmatprep.subr.mxu0 0.0
    %535 = vmatpush1.msra.mxu0 %v305
    %536 = vmatprep.subr.mxu0 0.0
    %537 = vmatpush1.msra.mxu0 %v303
    %538 = vmatprep.subr.mxu0 0.0
    %539 = vmatpush1.msra.mxu0 %v301
    %540 = vmatprep.subr.mxu0 0.0
    %541 = vmatpush1.msra.mxu0 %v299
    %542 = vmatprep.subr.mxu0 0.0
    %543 = vmatpush2.msra.mxu0 0.0
    %544 = vmatprep.subr.mxu0 0.0
    %545 = vmatpush2.msra.mxu0 0.0
    %546 = vmatprep.subr.mxu0 0.0
    %547 = vmatpush2.msra.mxu0 0.0
    %548 = vmatprep.subr.mxu0 0.0
    %549 = vmatpush2.msra.mxu0 0.0
    %550 = vmatprep.subr.mxu0 0.0
    %551 = vmatpush2.msra.mxu0 0.0
    %552 = vmatprep.subr.mxu0 0.0
    %553 = vmatpush2.msra.mxu0 0.0
    %554 = vmatprep.subr.mxu0 0.0
    %555 = vmatpush2.msra.mxu0 0.0
    %556 = vmatprep.subr.mxu0 0.0
    %557 = vmatpush2.msra.mxu0 0.0
    %558 = vmatprep.subr.mxu0 0.0
    %559 = vmatpush2.msra.mxu0 0.0
    %560 = vmatprep.subr.mxu0 0.0
    %561 = vmatpush2.msra.mxu0 0.0
    %562 = vmatprep.subr.mxu0 0.0
    %563 = vmatpush2.msra.mxu0 0.0
    %564 = vmatprep.subr.mxu0 0.0
    %565 = vmatpush2.msra.mxu0 0.0
    %566 = vmatprep.subr.mxu0 0.0
    %567 = vmatpush2.msra.mxu0 0.0
    %568 = vmatprep.subr.mxu0 0.0
    %569 = vmatpush2.msra.mxu0 0.0
    %570 = vmatprep.subr.mxu0 0.0
    %571 = vmatpush2.msra.mxu0 0.0
    %572 = vmatprep.subr.mxu0 0.0
    %573 = vmatpush2.msra.mxu0 0.0
    %574 = vmatprep.mubr.f32.mxu0 0.0
    %575 = vmatmul.mubr.f32.gmra.mxu0 %v339
    %v576 = vpop.f32.mrf.mxu0
    %v577 = vadd.f32 0.0, %v576
    %v578 = vpop.f32.mrf.mxu0
    %579 = vdwg.mxu0
    %v580 = vadd.f32 %v509, %v577
    %vm581 = vcmask 3072
    %582 = vst.msk [vmem:[#allocation3] sm:$0xf] %vm581, %v580
    // Predicated region
    $region22: #{tpu_custom_call.1} parent=1 // pred_check
      %p583 = pneg %p18
    $region23: #{tpu_custom_call.1} parent=1 // pred_check_branch
      %585 = sbr.rel (%p583) target = $region25
    $region24: #{tpu_custom_call.1} parent=1 // pred_region
      %v586 = vld [vmem:[#allocation3] sm:$0xf]
      %vm587 = vcmp.gt.f32.partialorder %v586, 0.0
      %v588 = vrcp.pop %v586
      %v589 = vsel %vm587, %v588, 0.0
      %v590 = vld [vmem:[#allocation2] sm:$0xf]
      %592 = vset.pattern.permute.xlu0 0
      %593 = vperm.xlu0 %592, %v589
      %v594 = vpop.permute.xlu0 %593
      %v596 = vmul.f32 %v590, %v594
      %597 = vst [vmem:[#allocation4] sm:$0xf] %v596
    $region25: #{tpu_custom_call.1} parent=1 // pred_fallthru
      _
    // Predicated region
    $region26: #{tpu_custom_call.1} parent=1 // pred_check
      _
    $region27: #{tpu_custom_call.1} parent=1 // pred_check_branch
      %599 = sbr.rel (0) target = $region29
    $region28: #{tpu_custom_call.1} parent=1 // pred_region
      %s601 = ssub.s32 64, 64
      %602 = vsyncadd [#allocation5], %s601
      %s604 = sshll.u32 [#allocation4], 4
      %s605 = int_to_ptr.vmem [resolvable:$true] %s604
      %607 = dma.vmem_to_hbm [thread:$0]  %s605, 64, %s4, [#allocation5]
    $region29: #{tpu_custom_call.1} parent=1 // pred_fallthru
      _
    // Predicated region
    $region30: #{tpu_custom_call.1} parent=1 // pred_check
      _
    $region31: #{tpu_custom_call.1} parent=1 // pred_check_branch
      %609 = sbr.rel (0) target = $region33
    $region32: #{tpu_custom_call.1} parent=1 // pred_region
      %610 = dma.done [#allocation5], 64
    $region33: #{tpu_custom_call.1} parent=1 // pred_fallthru
      _
    %611 = vsyncpa [#allocation5], 1

</llo_original>
